<compile_context>
chip_gen: v7x
topology: tpu7x:2x2x1
jax: 0.10.0
libtpu: 0.0.40
codegen_flags: <defaults>
</compile_context>

<pallas_src>
import functools

import jax
import jax.numpy as jnp
from jax.experimental import pallas as pl
from jax.experimental.pallas import tpu as pltpu

LANE = 128
NEG_SLOPE = 0.2        # GATConv default LeakyReLU slope
MASK_BIAS = -1e30      # additive bias for non-edges (masked softmax)


def _round_up(v, m):
    return ((v + m - 1) // m) * m


# ---------------------------------------------------------------------------
# Generation-aware knobs (all guarded; fall back to safe defaults).
# ---------------------------------------------------------------------------
def _device_kind():
    try:
        return jax.devices()[0].device_kind.lower()
    except Exception:
        return ""


@functools.lru_cache(maxsize=None)
def _softmax_dtype():
    kind = _device_kind()
    # v2-v5 have no bf16 VPU/EUP -> keep softmax elementwise math in f32 there.
    if any(v in kind for v in ("v2", "v3", "v4", "v5")) or kind == "":
        return jnp.float32
    return jnp.bfloat16


@functools.lru_cache(maxsize=None)
def _vmem_limit_bytes():
    kind = _device_kind()
    try:
        cap = int(pltpu.get_tpu_info().vmem_capacity_bytes)
    except Exception:
        cap = 0
    if cap <= 0:
        cap = (64 if "v7" in kind else 128) * 1024 * 1024
    hard = (52 if "v7" in kind else 100) * 1024 * 1024  # leave scratch headroom
    return min(int(cap * 0.8), hard)


def _compiler_params():
    return pltpu.CompilerParams(
        dimension_semantics=("parallel",),         # row tiles across TCs (v7x)
        vmem_limit_bytes=_vmem_limit_bytes())


def _pick_tile_n(n):
    kind = _device_kind()
    # Bigger tiles amortize per-step overhead (v5e/v6e); keep tiles small enough
    # on v7x that multiple row tiles exist to feed both TensorCores.
    cap = 128 if "v7" in kind else 256
    return min(cap, _round_up(n, 32))              # mult. of 32 -> int8 adj safe


@functools.lru_cache(maxsize=None)
def _buffered_one_supported():
    """Probe whether BlockSpec(pipeline_mode=pl.Buffered(1)) is available."""
    try:
        def k(x_ref, o_ref):
            o_ref[...] = x_ref[...]
        x = jnp.zeros((8, 128), jnp.float32)
        out = pl.pallas_call(
            k,
            out_shape=jax.ShapeDtypeStruct((8, 128), jnp.float32),
            grid=(1,),
            in_specs=[pl.BlockSpec((8, 128), lambda i: (0, 0),
                                   pipeline_mode=pl.Buffered(1))],
            out_specs=pl.BlockSpec((8, 128), lambda i: (0, 0)),
        )(x)
        jax.block_until_ready(out)
        return True
    except Exception:
        return False


def _resident_spec(block_shape, index_map):
    """Grid-invariant block: single-buffer it if the API supports it."""
    if _buffered_one_supported():
        return pl.BlockSpec(block_shape, index_map, pipeline_mode=pl.Buffered(1))
    return pl.BlockSpec(block_shape, index_map)


# ---------------------------------------------------------------------------
# Kernel A: fused projection  big = x @ w_all  (bf16 operands, f32 accum),
# split-stored into a source segment and a destination segment (both bf16).
# ---------------------------------------------------------------------------
def _project_kernel(x_ref, w_ref, src_ref, dst_ref, *, hc_pad):
    big = jnp.dot(x_ref[...].astype(jnp.bfloat16), w_ref[...],
                  preferred_element_type=jnp.float32)
    src_ref[...] = big[:, :hc_pad].astype(src_ref.dtype)     # 128-aligned slice
    dst_ref[...] = big[:, hc_pad:].astype(dst_ref.dtype)


# ---------------------------------------------------------------------------
# Kernel B: masked-softmax attention + Linear + bias (+ReLU), row-tiled over
# destination nodes.
#   adj_ref   : int8 {0,1} rows for the destination tile        [T, Np] (stream)
#   hsrc_ref  : per-head conv features for ALL sources          [Np, H*c_pad] (resident)
#   asrct_ref : source attention logits, pre-transposed         [8, Np] (resident)
#   dst_ref   : [lin | a_dst | a_src | 0pad] for the tile       [T, out_width+128] (stream)
#   bias_ref  : b_conv + b_lin, padded layout                   [1, out_width] (resident)
# ---------------------------------------------------------------------------
def _attend_kernel(adj_ref, hsrc_ref, asrct_ref, dst_ref, bias_ref, o_ref, *,
                   heads, c_pad, out_width, concat, apply_act, sm_dtype):
    # Additive adjacency bias (0 on edges/self-loops, -1e30 otherwise),
    # computed ONCE per tile -- replaces the per-head compare+select.
    adj_bias = ((1.0 - adj_ref[...].astype(jnp.float32)) * MASK_BIAS).astype(sm_dtype)

    a_dst = dst_ref[:, out_width:out_width + heads].astype(sm_dtype)   # [T, H]
    lin = dst_ref[:, :out_width].astype(jnp.float32)                   # [T, W]

    head_outs = []
    for hh in range(heads):
        logits = a_dst[:, hh:hh + 1] + asrct_ref[hh:hh + 1, :]          # [T, Np]
        logits = jnp.where(logits > 0, logits, NEG_SLOPE * logits)      # LeakyReLU
        logits = logits + adj_bias                                      # mask
        m = jnp.max(logits, axis=1, keepdims=True)
        p = jnp.exp(logits - m)           # masked entries underflow to exactly 0
        denom = jnp.sum(p.astype(jnp.float32), axis=1, keepdims=True)   # [T, 1]
        inv = pl.reciprocal(denom, approx=True)                         # EUP slot
        o_h = jnp.dot(p.astype(jnp.bfloat16),
                      hsrc_ref[:, hh * c_pad:(hh + 1) * c_pad],         # aligned
                      preferred_element_type=jnp.float32)               # [T, c_pad]
        head_outs.append(o_h * inv)       # post-scale instead of [T,Np] divide

    if concat:
        conv = jnp.concatenate(head_outs, axis=1)       # [T, H*c_pad], aligned
    else:
        conv = head_outs[0]
        for t in head_outs[1:]:
            conv = conv + t
        conv = conv * (1.0 / heads)                     # [T, c_pad]

    y = conv + lin + bias_ref[...]        # bias = b_conv + b_lin (pre-folded)
    if apply_act:
        y = jnp.maximum(y, 0.0)
    o_ref[...] = y.astype(o_ref.dtype)    # single lane-dense store


# ---------------------------------------------------------------------------
# One fused GATConv + Linear (+ReLU) layer = two pallas_calls.
# ---------------------------------------------------------------------------
def gat_lin_layer(x, adj_i8, params, *, heads, apply_act, tile_n, sm_dtype,
                  out_dtype):
    n_pad, f_in = x.shape
    c_pad = params["c_pad"]
    out_width = params["out_width"]
    concat = params["concat"]
    hc_pad = heads * c_pad
    d_cols = out_width + LANE             # [lin | a_dst | a_src | 0pad]
    p_pad = hc_pad + d_cols
    grid = (n_pad // tile_n,)
    cparams = _compiler_params()

    # (A) projection -> (source segment, destination segment)
    src_h, dst_big = pl.pallas_call(
        functools.partial(_project_kernel, hc_pad=hc_pad),
        out_shape=(jax.ShapeDtypeStruct((n_pad, hc_pad), jnp.bfloat16),
                   jax.ShapeDtypeStruct((n_pad, d_cols), jnp.bfloat16)),
        grid=grid,
        in_specs=[pl.BlockSpec((tile_n, f_in), lambda i: (i, 0)),
                  _resident_spec((f_in, p_pad), lambda i: (0, 0))],       # weights
        out_specs=(pl.BlockSpec((tile_n, hc_pad), lambda i: (i, 0)),
                   pl.BlockSpec((tile_n, d_cols), lambda i: (i, 0))),
        compiler_params=cparams,
    )(x, params["w_all"])

    # Hoisted out of the attention grid: ONE transpose of the source logits.
    a_src = dst_big[:, out_width + heads:out_width + 2 * heads]           # [Np, H]
    a_rows = max(8, _round_up(heads, 8))
    a_src_t = jnp.zeros((a_rows, n_pad), sm_dtype).at[:heads, :].set(
        jnp.transpose(a_src).astype(sm_dtype))                            # [8, Np]

    # (B) attention + combine
    kernel = functools.partial(
        _attend_kernel, heads=heads, c_pad=c_pad, out_width=out_width,
        concat=concat, apply_act=apply_act, sm_dtype=sm_dtype)
    return pl.pallas_call(
        kernel,
        out_shape=jax.ShapeDtypeStruct((n_pad, out_width), out_dtype),
        grid=grid,
        in_specs=[
            pl.BlockSpec((tile_n, n_pad), lambda i: (i, 0)),      # adj rows (int8 stream)
            _resident_spec((n_pad, hc_pad), lambda i: (0, 0)),    # source features
            _resident_spec((a_rows, n_pad), lambda i: (0, 0)),    # a_src^T
            pl.BlockSpec((tile_n, d_cols), lambda i: (i, 0)),     # dst-side tile
            _resident_spec((1, out_width), lambda i: (0, 0)),     # fused bias
        ],
        out_specs=pl.BlockSpec((tile_n, out_width), lambda i: (i, 0)),
        compiler_params=cparams,
    )(adj_i8, src_h, a_src_t, dst_big, params["b_total"])


# ---------------------------------------------------------------------------
# Parameter construction (deterministic, synthetic; matches GATLinNet shapes).
# Per-head output columns are lane-padded to c_pad = round_up(c_out, 128) so
# every in-kernel slice / store is 128-lane aligned; pad columns are exactly 0.
# ---------------------------------------------------------------------------
def init_gat_lin_net(key, in_channels, hidden_channels, num_layers,
                     out_channels=1, heads=2):
    assert 2 * heads <= LANE

    def pad_cols(mat, c_out, c_pad, concat):
        if concat:
            m = mat.reshape(mat.shape[:-1] + (heads, c_out))
            pad = [(0, 0)] * (m.ndim - 1) + [(0, c_pad - c_out)]
            return jnp.pad(m, pad).reshape(mat.shape[:-1] + (heads * c_pad,))
        pad = [(0, 0)] * (mat.ndim - 1) + [(0, c_pad - c_out)]
        return jnp.pad(mat, pad)

    def one_layer(k, f_in, c_out, concat):
        ks = jax.random.split(k, 6)
        c_pad = _round_up(c_out, LANE)
        out_dim = heads * c_out if concat else c_out
        out_width = heads * c_pad if concat else c_pad
        scale = 1.0 / jnp.sqrt(jnp.float32(f_in))
        w_conv = jax.random.normal(ks[0], (f_in, heads * c_out), jnp.float32) * scale
        att_src = jax.random.normal(ks[1], (heads, c_out), jnp.float32) * 0.5
        att_dst = jax.random.normal(ks[2], (heads, c_out), jnp.float32) * 0.5
        b_conv = jax.random.normal(ks[3], (1, out_dim), jnp.float32) * 0.1
        w_lin = jax.random.normal(ks[4], (f_in, out_dim), jnp.float32) * scale
        b_lin = jax.random.normal(ks[5], (1, out_dim), jnp.float32) * 0.1

        # Source segment: per-head conv weights, each head lane-padded.
        w_src = pad_cols(w_conv, c_out, c_pad, True)                    # [f_in, H*c_pad]
        # Fold attention projections: <h_head, att_h> == x @ (W_conv_h @ att_h)
        w_asrc = jnp.concatenate(
            [w_conv[:, h * c_out:(h + 1) * c_out] @ att_src[h][:, None]
             for h in range(heads)], axis=1)                            # [f_in, H]
        w_adst = jnp.concatenate(
            [w_conv[:, h * c_out:(h + 1) * c_out] @ att_dst[h][:, None]
             for h in range(heads)], axis=1)                            # [f_in, H]
        # Destination segment: [ lin(out_width) | a_dst | a_src | 0pad ].
        w_lin_p = pad_cols(w_lin, c_out, c_pad, concat)                 # [f_in, out_width]
        w_dst = jnp.concatenate(
            [w_lin_p, w_adst, w_asrc,
             jnp.zeros((f_in, LANE - 2 * heads), jnp.float32)], axis=1)
        w_all = jnp.concatenate([w_src, w_dst], axis=1)                 # [f_in, hc_pad+d_cols]
        b_total = pad_cols(b_conv + b_lin, c_out, c_pad, concat)        # [1, out_width]
        return {"w_all": w_all.astype(jnp.bfloat16),
                "b_total": b_total.astype(jnp.float32),
                "c_pad": c_pad, "out_width": out_width, "concat": concat}

    layers = []
    keys = jax.random.split(key, num_layers)
    f_in = in_channels
    if num_layers > 1:
        layers.append(one_layer(keys[0], f_in, hidden_channels, True))
        f_in = layers[-1]["out_width"]
    for i in range(num_layers - 2):
        layers.append(one_layer(keys[1 + i], f_in, hidden_channels, True))
        f_in = layers[-1]["out_width"]
    layers.append(one_layer(keys[num_layers - 1], f_in, out_channels, False))
    return layers


def gat_lin_net_forward(x_pad, adj_i8, layers, heads, tile_n, sm_dtype):
    h = x_pad
    last = len(layers) - 1
    for i, p in enumerate(layers):
        out_dtype = jnp.float32 if i == last else jnp.bfloat16   # bf16 hidden acts
        h = gat_lin_layer(h, adj_i8, p, heads=heads, apply_act=(i != last),
                          tile_n=tile_n, sm_dtype=sm_dtype, out_dtype=out_dtype)
    return h


# ---------------------------------------------------------------------------
# Pure-JAX reference mirroring the kernel math (same bf16/softmax dtypes; only
# the approx reciprocal and accumulation order differ) for a sanity check.
# ---------------------------------------------------------------------------
def _ref_layer(x, adj_i8, p, heads, apply_act, sm_dtype, out_dtype):
    c_pad, concat, out_width = p["c_pad"], p["concat"], p["out_width"]
    hc_pad = heads * c_pad
    big = jnp.dot(x.astype(jnp.bfloat16), p["w_all"],
                  preferred_element_type=jnp.float32)
    src_h = big[:, :hc_pad].astype(jnp.bfloat16)
    dstb = big[:, hc_pad:].astype(jnp.bfloat16)
    lin = dstb[:, :out_width].astype(jnp.float32)
    a_dst = dstb[:, out_width:out_width + heads].astype(sm_dtype)
    a_src = dstb[:, out_width + heads:out_width + 2 * heads].astype(sm_dtype)
    adj_bias = ((1.0 - adj_i8.astype(jnp.float32)) * MASK_BIAS).astype(sm_dtype)
    outs = []
    for hh in range(heads):
        logits = a_dst[:, hh:hh + 1] + a_src[:, hh][None, :]
        logits = jnp.where(logits > 0, logits, NEG_SLOPE * logits)
        logits = logits + adj_bias
        m = jnp.max(logits, axis=1, keepdims=True)
        pm = jnp.exp(logits - m)
        den = jnp.sum(pm.astype(jnp.float32), axis=1, keepdims=True)
        o_h = jnp.dot(pm.astype(jnp.bfloat16), src_h[:, hh * c_pad:(hh + 1) * c_pad],
                      preferred_element_type=jnp.float32)
        outs.append(o_h / den)
    conv = jnp.concatenate(outs, axis=1) if concat else sum(outs) / heads
    y = conv + lin + p["b_total"]
    if apply_act:
        y = jnp.maximum(y, 0.0)
    return y.astype(out_dtype)


def _ref_forward(x_pad, adj_i8, layers, heads, sm_dtype):
    h = x_pad
    last = len(layers) - 1
    for i, p in enumerate(layers):
        out_dtype = jnp.float32 if i == last else jnp.bfloat16
        h = _ref_layer(h, adj_i8, p, heads, apply_act=(i != last),
                       sm_dtype=sm_dtype, out_dtype=out_dtype)
    return h


# ---------------------------------------------------------------------------
if __name__ == "__main__":
    key = jax.random.PRNGKey(0)
    k_x, k_p = jax.random.split(key, 2)

    N, F_IN = 16, 8
    HIDDEN, NUM_LAYERS, HEADS, OUT = 8, 3, 2, 1

    x = jax.random.normal(k_x, (N, F_IN), jnp.float32)

    # Deterministic edge_index [2, E]: ring edges both directions + extras.
    src = jnp.concatenate([jnp.arange(N), (jnp.arange(N) + 1) % N,
                           jnp.array([0, 3, 7, 11])])
    dst = jnp.concatenate([(jnp.arange(N) + 1) % N, jnp.arange(N),
                           jnp.array([8, 12, 2, 5])])
    edge_index = jnp.stack([src, dst])                          # [2, E]

    tile_n = _pick_tile_n(N)
    n_pad = _round_up(N, tile_n)
    sm_dtype = _softmax_dtype()

    # Padded features and dense int8 adjacency mask adj[i, j] = 1 iff j -> i,
    # with self-loops on every row (incl. padded) so no softmax row is empty.
    x_pad = jnp.zeros((n_pad, F_IN), jnp.float32).at[:N].set(x)
    adj = jnp.zeros((n_pad, n_pad), jnp.int8)
    adj = adj.at[edge_index[1], edge_index[0]].set(1)
    adj = adj.at[jnp.arange(n_pad), jnp.arange(n_pad)].set(1)

    layers = init_gat_lin_net(k_p, F_IN, HIDDEN, NUM_LAYERS,
                              out_channels=OUT, heads=HEADS)

    out_pad = gat_lin_net_forward(x_pad, adj, layers, HEADS, tile_n, sm_dtype)
    out_pad = jax.block_until_ready(out_pad)
    out = out_pad[:N, :OUT]
    assert out.shape == (N, OUT), out.shape

    ref = _ref_forward(x_pad, adj, layers, HEADS, sm_dtype)[:N, :OUT]
    err = float(jnp.max(jnp.abs(out - ref)))
    assert jnp.allclose(out, ref, atol=5e-2, rtol=5e-2), err

    print("KERNEL_OK")
</pallas_src>

<mosaic_0001>
module attributes {stable_mosaic.version = 11 : i64} {
  func.func @k(%arg0: i32, %arg1: memref<8x128xf32, #tpu.memory_space<vmem>>, %arg2: memref<8x128xf32, #tpu.memory_space<vmem>>) attributes {dimension_semantics = [#tpu.dimension_semantics<arbitrary>], iteration_bounds = array<i64: 1>, scalar_prefetch = 0 : i64, scratch_operands = 0 : i64, tpu.core_type = #tpu.core_type<tc>, window_params = [{pipeline_mode = #tpu.pipeline_mode<synchronous>, transform_indices = @transform_0, window_bounds = array<i64: 8, 128>}, {pipeline_mode = #tpu.pipeline_mode<synchronous>, transform_indices = @transform_1, window_bounds = array<i64: 8, 128>}]} {
    %c0 = arith.constant 0 : index
    %c0_0 = arith.constant 0 : index
    %0 = vector.load %arg1[%c0, %c0_0] : memref<8x128xf32, #tpu.memory_space<vmem>>, vector<8x128xf32>
    %c0_1 = arith.constant 0 : index
    %c0_2 = arith.constant 0 : index
    %1 = vector.load %arg2[%c0_1, %c0_2] : memref<8x128xf32, #tpu.memory_space<vmem>>, vector<8x128xf32>
    tpu.vector_store %arg2[%c0_1, %c0_2], %0 {strides = array<i32>} : memref<8x128xf32, #tpu.memory_space<vmem>>, vector<8x128xf32>,
    return
  }
  func.func @transform_0(%arg0: i32) -> (i32, i32) {
    %c0_i32 = arith.constant 0 : i32
    %c0_i32_0 = arith.constant 0 : i32
    %c0_i32_1 = arith.constant 0 : i32
    return %c0_i32, %c0_i32_0 : i32, i32
  }
  func.func @transform_1(%arg0: i32) -> (i32, i32) {
    %c0_i32 = arith.constant 0 : i32
    %c0_i32_0 = arith.constant 0 : i32
    %c0_i32_1 = arith.constant 0 : i32
    return %c0_i32, %c0_i32_0 : i32, i32
  }
}

module attributes {stable_mosaic.version = 11 : i64} {
  func.func @_project_kernel(%arg0: i32, %arg1: memref<32x8xf32, #tpu.memory_space<vmem>>, %arg2: memref<8x640xbf16, #tpu.memory_space<vmem>>, %arg3: memref<32x256xbf16, #tpu.memory_space<vmem>>, %arg4: memref<32x384xbf16, #tpu.memory_space<vmem>>) attributes {dimension_semantics = [#tpu.dimension_semantics<parallel>], iteration_bounds = array<i64: 1>, scalar_prefetch = 0 : i64, scratch_operands = 0 : i64, tpu.core_type = #tpu.core_type<tc>, window_params = [{transform_indices = @transform_0, window_bounds = array<i64: 32, 8>}, {pipeline_mode = #tpu.pipeline_mode<synchronous>, transform_indices = @transform_1, window_bounds = array<i64: 8, 640>}, {transform_indices = @transform_2, window_bounds = array<i64: 32, 256>}, {transform_indices = @transform_3, window_bounds = array<i64: 32, 384>}]} {
    %c0 = arith.constant 0 : index
    %c0_0 = arith.constant 0 : index
    %0 = vector.load %arg1[%c0, %c0_0] : memref<32x8xf32, #tpu.memory_space<vmem>>, vector<32x8xf32>
    %1 = arith.truncf %0 : vector<32x8xf32> to vector<32x8xbf16>
    %c0_1 = arith.constant 0 : index
    %c0_2 = arith.constant 0 : index
    %2 = vector.load %arg2[%c0_1, %c0_2] : memref<8x640xbf16, #tpu.memory_space<vmem>>, vector<8x640xbf16>
    %cst = arith.constant dense<0.000000e+00> : vector<32x640xf32>
    %3 = tpu.matmul %1, %2, %cst {dimension_numbers = #tpu.dot_dimension_numbers<[1], [0], [0], [1], [0, 0, 1, 1], [], []>} : vector<32x8xbf16>, vector<8x640xbf16>, vector<32x640xf32> -> vector<32x640xf32>
    %4 = vector.extract_strided_slice %3 {offsets = [0, 0], sizes = [32, 256], strides = [1, 1]} : vector<32x640xf32> to vector<32x256xf32>
    %5 = arith.truncf %4 : vector<32x256xf32> to vector<32x256xbf16>
    %c0_3 = arith.constant 0 : index
    %c0_4 = arith.constant 0 : index
    %6 = vector.load %arg3[%c0_3, %c0_4] : memref<32x256xbf16, #tpu.memory_space<vmem>>, vector<32x256xbf16>
    tpu.vector_store %arg3[%c0_3, %c0_4], %5 {strides = array<i32>} : memref<32x256xbf16, #tpu.memory_space<vmem>>, vector<32x256xbf16>,
    %7 = vector.extract_strided_slice %3 {offsets = [0, 256], sizes = [32, 384], strides = [1, 1]} : vector<32x640xf32> to vector<32x384xf32>
    %8 = arith.truncf %7 : vector<32x384xf32> to vector<32x384xbf16>
    %c0_5 = arith.constant 0 : index
    %c0_6 = arith.constant 0 : index
    %9 = vector.load %arg4[%c0_5, %c0_6] : memref<32x384xbf16, #tpu.memory_space<vmem>>, vector<32x384xbf16>
    tpu.vector_store %arg4[%c0_5, %c0_6], %8 {strides = array<i32>} : memref<32x384xbf16, #tpu.memory_space<vmem>>, vector<32x384xbf16>,
    return
  }
  func.func @transform_0(%arg0: i32) -> (i32, i32) {
    %c0_i32 = arith.constant 0 : i32
    %c0_i32_0 = arith.constant 0 : i32
    return %arg0, %c0_i32 : i32, i32
  }
  func.func @transform_1(%arg0: i32) -> (i32, i32) {
    %c0_i32 = arith.constant 0 : i32
    %c0_i32_0 = arith.constant 0 : i32
    %c0_i32_1 = arith.constant 0 : i32
    return %c0_i32, %c0_i32_0 : i32, i32
  }
  func.func @transform_2(%arg0: i32) -> (i32, i32) {
    %c0_i32 = arith.constant 0 : i32
    %c0_i32_0 = arith.constant 0 : i32
    return %arg0, %c0_i32 : i32, i32
  }
  func.func @transform_3(%arg0: i32) -> (i32, i32) {
    %c0_i32 = arith.constant 0 : i32
    %c0_i32_0 = arith.constant 0 : i32
    return %arg0, %c0_i32 : i32, i32
  }
}

</mosaic_0001>

<llo_original>
// kernel: tpu_custom_call.1
$region0: #{tpu_custom_call.1}
  #allocation0 [shape = 'u32[]', space=smem, size = 0x4, offset = 0x4, fixed_abs, tag = 'smem constant byte address 0x4 - core index']
  #allocation1 [shape = 'u32[144,128]{1,0:T(1,128)}', space=vmem, size = 0x12000, scoped, tag = 'internal scratch']
  %s0 = inlined_call_operand.hbm [shape: f32[8,128], index: 0, kind: input, shape index: {}]
  %s1 = inlined_call_operand.hbm [shape: f32[8,128], index: 1, kind: output, shape index: {}]
  %s2 = sld [smem:[#allocation0]]
  $region18: #{tpu_custom_call.1} parent=0
    _
  %s4 = ssub.s32 1, %s2
  %s5 = scalar_select 0, %s4, %s2
  $region1: #{tpu_custom_call.1} parent=0
    #allocation2 [shape = 'u8[4096]{0}', space=vmem, size = 0x1000, scoped, tag = 'input window, operand 0, single buffered']
    #allocation3 [shape = 's32[1]{0}', space=sflag, size = 0x4, scoped, tag = 'scoped memory for tpu_custom_call.1']
    #allocation4 [shape = 's32[1]{0}', space=sflag, size = 0x4, scoped, tag = 'scoped memory for tpu_custom_call.1']
    #allocation5 [shape = 'u8[4096]{0}', space=vmem, size = 0x1000, scoped, tag = 'output window, operand 0, single buffered']
    %6 = vsyncpa [#allocation3], 0
    %7 = vsyncpa [#allocation4], 0
    // Predicated region
    $region2: #{tpu_custom_call.1} parent=1 // pred_check
      _
    $region3: #{tpu_custom_call.1} parent=1 // pred_check_branch
      %9 = sbr.rel (0) target = $region5
    $region4: #{tpu_custom_call.1} parent=1 // pred_region
      %s11 = ssub.s32 128, 128
      %12 = vsyncadd [#allocation3], %s11
      %s14 = sshll.u32 [#allocation2], 4
      %s15 = int_to_ptr.vmem [resolvable:$true] %s14
      %17 = dma.hbm_to_vmem [thread:$0]  %s0, 128, %s15, [#allocation3]
    $region5: #{tpu_custom_call.1} parent=1 // pred_fallthru
      _
    // Predicated region
    $region6: #{tpu_custom_call.1} parent=1 // pred_check
      _
    $region7: #{tpu_custom_call.1} parent=1 // pred_check_branch
      %19 = sbr.rel (0) target = $region9
    $region8: #{tpu_custom_call.1} parent=1 // pred_region
      %20 = dma.done [#allocation3], 128
    $region9: #{tpu_custom_call.1} parent=1 // pred_fallthru
      _
    %v21 = vld [vmem:[#allocation2] sm:$0xff]
    %22 = vst [vmem:[#allocation5] sm:$0xff] %v21
    // Predicated region
    $region10: #{tpu_custom_call.1} parent=1 // pred_check
      _
    $region11: #{tpu_custom_call.1} parent=1 // pred_check_branch
      %24 = sbr.rel (0) target = $region13
    $region12: #{tpu_custom_call.1} parent=1 // pred_region
      %s26 = ssub.s32 128, 128
      %27 = vsyncadd [#allocation4], %s26
      %s29 = sshll.u32 [#allocation5], 4
      %s30 = int_to_ptr.vmem [resolvable:$true] %s29
      %32 = dma.vmem_to_hbm [thread:$0]  %s30, 128, %s1, [#allocation4]
    $region13: #{tpu_custom_call.1} parent=1 // pred_fallthru
      _
    // Predicated region
    $region14: #{tpu_custom_call.1} parent=1 // pred_check
      _
    $region15: #{tpu_custom_call.1} parent=1 // pred_check_branch
      %34 = sbr.rel (0) target = $region17
    $region16: #{tpu_custom_call.1} parent=1 // pred_region
      %35 = dma.done [#allocation4], 128
    $region17: #{tpu_custom_call.1} parent=1 // pred_fallthru
      _
    %36 = vsyncpa [#allocation3], 1
    %37 = vsyncpa [#allocation4], 1

// kernel: tpu_custom_call.1
$region0: #{tpu_custom_call.1}
  #allocation0 [shape = 'u32[]', space=smem, size = 0x4, offset = 0x4, fixed_abs, tag = 'smem constant byte address 0x4 - core index']
  #allocation1 [shape = 'u32[144,128]{1,0:T(1,128)}', space=vmem, size = 0x12000, scoped, tag = 'internal scratch']
  %s0 = inlined_call_operand.hbm [shape: f32[32,8], index: 0, kind: input, shape index: {}]
  %s1 = inlined_call_operand.hbm [shape: bf16[8,640], index: 1, kind: input, shape index: {}]
  %s2 = inlined_call_operand.hbm [shape: bf16[32,256], index: 2, kind: output, shape index: {0}]
  %s3 = inlined_call_operand.hbm [shape: bf16[32,384], index: 3, kind: output, shape index: {1}]
  %4 = xla_tuple %s2, %s3
  %s5 = sld [smem:[#allocation0]]
  $region34: #{tpu_custom_call.1} parent=0
    _
  %s7 = ssub.s32 1, %s5
  %s8 = scalar_select 0, %s7, %s5
  $region1: #{tpu_custom_call.1} parent=0
    #allocation2 [shape = 'u8[16384]{0}', space=vmem, size = 0x4000, scoped, tag = 'input window, operand 0, single buffered']
    #allocation3 [shape = 's32[1]{0}', space=sflag, size = 0x4, scoped, tag = 'scoped memory for tpu_custom_call.1']
    #allocation4 [shape = 's32[1]{0}', space=sflag, size = 0x4, scoped, tag = 'scoped memory for tpu_custom_call.1']
    #allocation5 [shape = 'u8[10240]{0}', space=vmem, size = 0x2800, scoped, tag = 'input window, operand 1, single buffered']
    #allocation6 [shape = 's32[1]{0}', space=sflag, size = 0x4, scoped, tag = 'scoped memory for tpu_custom_call.1']
    #allocation7 [shape = 'u8[16384]{0}', space=vmem, size = 0x4000, scoped, tag = 'output window, operand 0, single buffered']
    #allocation8 [shape = 'u8[24576]{0}', space=vmem, size = 0x6000, scoped, tag = 'output window, operand 1, single buffered']
    #allocation9 [shape = 's32[1]{0}', space=sflag, size = 0x4, scoped, tag = 'scoped memory for tpu_custom_call.1']
    %9 = vsyncpa [#allocation3], 0
    %10 = vsyncpa [#allocation6], 0
    %11 = vsyncpa [#allocation4], 0
    %12 = vsyncpa [#allocation9], 0
    // Predicated region
    $region2: #{tpu_custom_call.1} parent=1 // pred_check
      _
    $region3: #{tpu_custom_call.1} parent=1 // pred_check_branch
      %14 = sbr.rel (0) target = $region5
    $region4: #{tpu_custom_call.1} parent=1 // pred_region
      %s16 = ssub.s32 512, 512
      %17 = vsyncadd [#allocation3], %s16
      %s18 = sshll.u32 [#allocation2], 4
      %s19 = int_to_ptr.vmem [resolvable:$true] %s18
      %24 = dma.hbm_to_vmem [thread:$0]  %s0, 512, %s19, [#allocation3], 128, 128, 8
    $region5: #{tpu_custom_call.1} parent=1 // pred_fallthru
      _
    // Predicated region
    $region6: #{tpu_custom_call.1} parent=1 // pred_check
      _
    $region7: #{tpu_custom_call.1} parent=1 // pred_check_branch
      %26 = sbr.rel (0) target = $region9
    $region8: #{tpu_custom_call.1} parent=1 // pred_region
      %s28 = ssub.s32 320, 320
      %29 = vsyncadd [#allocation6], %s28
      %s31 = sshll.u32 [#allocation5], 4
      %s32 = int_to_ptr.vmem [resolvable:$true] %s31
      %34 = dma.hbm_to_vmem [thread:$0]  %s1, 320, %s32, [#allocation6]
    $region9: #{tpu_custom_call.1} parent=1 // pred_fallthru
      _
    // Predicated region
    $region10: #{tpu_custom_call.1} parent=1 // pred_check
      _
    $region11: #{tpu_custom_call.1} parent=1 // pred_check_branch
      %36 = sbr.rel (0) target = $region13
    $region12: #{tpu_custom_call.1} parent=1 // pred_region
      %37 = dma.done [#allocation3], 512
    $region13: #{tpu_custom_call.1} parent=1 // pred_fallthru
      _
    // Predicated region
    $region14: #{tpu_custom_call.1} parent=1 // pred_check
      _
    $region15: #{tpu_custom_call.1} parent=1 // pred_check_branch
      %39 = sbr.rel (0) target = $region17
    $region16: #{tpu_custom_call.1} parent=1 // pred_region
      %40 = dma.done [#allocation6], 320
    $region17: #{tpu_custom_call.1} parent=1 // pred_fallthru
      _
    %v42 = vld [vmem:[#allocation2] sm:$0xff]
    %v43 = vld [vmem:[#allocation2 + $0x8] sm:$0xff]
    %v44 = vld [vmem:[#allocation2 + $0x10] sm:$0xff]
    %v45 = vld [vmem:[#allocation2 + $0x18] sm:$0xff]
    %v46 = vpack.c.bf16 %v43, %v42
    %v47 = vpack.c.bf16 %v45, %v44
    %v48 = vld [vmem:[#allocation5] sm:$0xff]
    %v49 = vld [vmem:[#allocation5 + $0x8] sm:$0xff]
    %v50 = vld [vmem:[#allocation5 + $0x10] sm:$0xf]
    %v54 = vunpack.c.l.b16 %v48
    %v55 = vunpack.c.h.b16 %v48
    %v56 = vunpack.c.l.b16 %v49
    %v57 = vunpack.c.h.b16 %v49
    %v58 = vunpack.c.l.b16 %v50
    %v59 = vpack.c.b16 %v54, %v54
    %v60 = vpack.c.b16 %v55, %v55
    %v61 = vpack.c.b16 %v56, %v56
    %v62 = vpack.c.b16 %v57, %v57
    %v63 = vpack.c.b16 %v58, %v58
    %vm64 = vcmask 64512
    %v66 = vsel %vm64, %v46, 0
    %v69 = vsel %vm64, %v47, 0
    %vm71 = vcmask 1043456
    %v73 = vsel %vm71, %v59, 0
    %v76 = vsel %vm71, %v60, 0
    %v79 = vsel %vm71, %v61, 0
    %v82 = vsel %vm71, %v62, 0
    %v85 = vsel %vm71, %v63, 0
    %87 = vmatprep.subr.bf16.mxu0 %v76
    %88 = vmatpush1.bf16.msra.mxu0 %v73
    %89 = vmatprep.subr.bf16.mxu0 0
    %90 = vmatpush1.bf16.msra.mxu0 0
    %91 = vmatprep.subr.bf16.mxu0 0
    %92 = vmatpush1.bf16.msra.mxu0 0
    %93 = vmatprep.subr.bf16.mxu0 0
    %94 = vmatpush1.bf16.msra.mxu0 0
    %95 = vmatprep.subr.bf16.mxu0 0
    %96 = vmatpush1.bf16.msra.mxu0 0
    %97 = vmatprep.subr.bf16.mxu0 0
    %98 = vmatpush1.bf16.msra.mxu0 0
    %99 = vmatprep.subr.bf16.mxu0 0
    %100 = vmatpush1.bf16.msra.mxu0 0
    %101 = vmatprep.subr.bf16.mxu0 0
    %102 = vmatpush1.bf16.msra.mxu0 0
    %103 = vmatprep.subr.bf16.mxu0 0
    %104 = vmatpush1.bf16.msra.mxu0 0
    %105 = vmatprep.subr.bf16.mxu0 0
    %106 = vmatpush1.bf16.msra.mxu0 0
    %107 = vmatprep.subr.bf16.mxu0 0
    %108 = vmatpush1.bf16.msra.mxu0 0
    %109 = vmatprep.subr.bf16.mxu0 0
    %110 = vmatpush1.bf16.msra.mxu0 0
    %111 = vmatprep.subr.bf16.mxu0 0
    %112 = vmatpush1.bf16.msra.mxu0 0
    %113 = vmatprep.subr.bf16.mxu0 0
    %114 = vmatpush1.bf16.msra.mxu0 0
    %115 = vmatprep.subr.bf16.mxu0 0
    %116 = vmatpush1.bf16.msra.mxu0 0
    %117 = vmatprep.subr.bf16.mxu0 0
    %118 = vmatpush1.bf16.msra.mxu0 0
    %119 = vmatprep.mubr.bf16.mxu0 0
    %120 = vmatmul.mubr.bf16.gmra.mrb[0].mxu0 %v66
    %v121 = vpop.f32.mrb[0].mxu0
    %v122 = vadd.f32 0.0, %v121
    %v123 = vpop.f32.mrb[0].mxu0
    %v124 = vadd.f32 0.0, %v123
    %v125 = vpop.f32.mrb[0].mxu0
    %v126 = vadd.f32 0.0, %v125
    %v127 = vpop.f32.mrb[0].mxu0
    %v128 = vadd.f32 0.0, %v127
    %129 = vmatprep.mubr.bf16.mxu0 0
    %130 = vmatmul.mubr.bf16.gmra.mrb[0].mxu0 %v69
    %v131 = vpop.f32.mrb[0].mxu0
    %v132 = vadd.f32 0.0, %v131
    %v133 = vpop.f32.mrb[0].mxu0
    %v134 = vadd.f32 0.0, %v133
    %v135 = vpop.f32.mrb[0].mxu0
    %v136 = vadd.f32 0.0, %v135
    %v137 = vpop.f32.mrb[0].mxu0
    %v138 = vadd.f32 0.0, %v137
    %139 = vdwg.mxu0
    %140 = vmatprep.subr.bf16.mxu0 %v82
    %141 = vmatpush1.bf16.msra.mxu0 %v79
    %142 = vmatprep.subr.bf16.mxu0 0
    %143 = vmatpush1.bf16.msra.mxu0 0
    %144 = vmatprep.subr.bf16.mxu0 0
    %145 = vmatpush1.bf16.msra.mxu0 0
    %146 = vmatprep.subr.bf16.mxu0 0
    %147 = vmatpush1.bf16.msra.mxu0 0
    %148 = vmatprep.subr.bf16.mxu0 0
    %149 = vmatpush1.bf16.msra.mxu0 0
    %150 = vmatprep.subr.bf16.mxu0 0
    %151 = vmatpush1.bf16.msra.mxu0 0
    %152 = vmatprep.subr.bf16.mxu0 0
    %153 = vmatpush1.bf16.msra.mxu0 0
    %154 = vmatprep.subr.bf16.mxu0 0
    %155 = vmatpush1.bf16.msra.mxu0 0
    %156 = vmatprep.subr.bf16.mxu0 0
    %157 = vmatpush1.bf16.msra.mxu0 0
    %158 = vmatprep.subr.bf16.mxu0 0
    %159 = vmatpush1.bf16.msra.mxu0 0
    %160 = vmatprep.subr.bf16.mxu0 0
    %161 = vmatpush1.bf16.msra.mxu0 0
    %162 = vmatprep.subr.bf16.mxu0 0
    %163 = vmatpush1.bf16.msra.mxu0 0
    %164 = vmatprep.subr.bf16.mxu0 0
    %165 = vmatpush1.bf16.msra.mxu0 0
    %166 = vmatprep.subr.bf16.mxu0 0
    %167 = vmatpush1.bf16.msra.mxu0 0
    %168 = vmatprep.subr.bf16.mxu0 0
    %169 = vmatpush1.bf16.msra.mxu0 0
    %170 = vmatprep.subr.bf16.mxu0 0
    %171 = vmatpush1.bf16.msra.mxu0 0
    %172 = vmatprep.mubr.bf16.mxu0 0
    %173 = vmatmul.mubr.bf16.gmra.mrb[0].mxu0 %v66
    %v174 = vpop.f32.mrb[0].mxu0
    %v175 = vadd.f32 0.0, %v174
    %v176 = vpop.f32.mrb[0].mxu0
    %v177 = vadd.f32 0.0, %v176
    %v178 = vpop.f32.mrb[0].mxu0
    %v179 = vadd.f32 0.0, %v178
    %v180 = vpop.f32.mrb[0].mxu0
    %v181 = vadd.f32 0.0, %v180
    %182 = vmatprep.mubr.bf16.mxu0 0
    %183 = vmatmul.mubr.bf16.gmra.mrb[0].mxu0 %v69
    %v184 = vpop.f32.mrb[0].mxu0
    %v185 = vadd.f32 0.0, %v184
    %v186 = vpop.f32.mrb[0].mxu0
    %v187 = vadd.f32 0.0, %v186
    %v188 = vpop.f32.mrb[0].mxu0
    %v189 = vadd.f32 0.0, %v188
    %v190 = vpop.f32.mrb[0].mxu0
    %v191 = vadd.f32 0.0, %v190
    %192 = vdwg.mxu0
    %193 = vmatprep.subr.bf16.mxu0 0
    %194 = vmatpush1.bf16.msra.mxu0 %v85
    %195 = vmatprep.subr.bf16.mxu0 0
    %196 = vmatpush1.bf16.msra.mxu0 0
    %197 = vmatprep.subr.bf16.mxu0 0
    %198 = vmatpush1.bf16.msra.mxu0 0
    %199 = vmatprep.subr.bf16.mxu0 0
    %200 = vmatpush1.bf16.msra.mxu0 0
    %201 = vmatprep.subr.bf16.mxu0 0
    %202 = vmatpush1.bf16.msra.mxu0 0
    %203 = vmatprep.subr.bf16.mxu0 0
    %204 = vmatpush1.bf16.msra.mxu0 0
    %205 = vmatprep.subr.bf16.mxu0 0
    %206 = vmatpush1.bf16.msra.mxu0 0
    %207 = vmatprep.subr.bf16.mxu0 0
    %208 = vmatpush1.bf16.msra.mxu0 0
    %209 = vmatprep.subr.bf16.mxu0 0
    %210 = vmatpush1.bf16.msra.mxu0 0
    %211 = vmatprep.subr.bf16.mxu0 0
    %212 = vmatpush1.bf16.msra.mxu0 0
    %213 = vmatprep.subr.bf16.mxu0 0
    %214 = vmatpush1.bf16.msra.mxu0 0
    %215 = vmatprep.subr.bf16.mxu0 0
    %216 = vmatpush1.bf16.msra.mxu0 0
    %217 = vmatprep.subr.bf16.mxu0 0
    %218 = vmatpush1.bf16.msra.mxu0 0
    %219 = vmatprep.subr.bf16.mxu0 0
    %220 = vmatpush1.bf16.msra.mxu0 0
    %221 = vmatprep.subr.bf16.mxu0 0
    %222 = vmatpush1.bf16.msra.mxu0 0
    %223 = vmatprep.subr.bf16.mxu0 0
    %224 = vmatpush1.bf16.msra.mxu0 0
    %225 = vmatprep.mubr.bf16.mxu0 0
    %226 = vmatmul.mubr.bf16.gmra.mrb[0].mxu0 %v66
    %v227 = vpop.f32.mrb[0].mxu0
    %v228 = vadd.f32 0.0, %v227
    %v229 = vpop.f32.mrb[0].mxu0
    %v230 = vpop.f32.mrb[0].mxu0
    %v231 = vadd.f32 0.0, %v230
    %v232 = vpop.f32.mrb[0].mxu0
    %233 = vmatprep.mubr.bf16.mxu0 0
    %234 = vmatmul.mubr.bf16.gmra.mrb[0].mxu0 %v69
    %v235 = vpop.f32.mrb[0].mxu0
    %v236 = vadd.f32 0.0, %v235
    %v237 = vpop.f32.mrb[0].mxu0
    %v238 = vpop.f32.mrb[0].mxu0
    %v239 = vadd.f32 0.0, %v238
    %v240 = vpop.f32.mrb[0].mxu0
    %241 = vdwg.mxu0
    %v242 = vpack.c.bf16 %v126, %v122
    %v243 = vpack.c.bf16 %v128, %v124
    %v244 = vpack.c.bf16 %v136, %v132
    %v245 = vpack.c.bf16 %v138, %v134
    %v250 = vunpack.c.l.b16 %v242
    %v251 = vunpack.c.l.b16 %v243
    %v252 = vunpack.c.h.b16 %v242
    %v253 = vunpack.c.h.b16 %v243
    %v254 = vunpack.c.l.b16 %v244
    %v255 = vunpack.c.l.b16 %v245
    %v256 = vunpack.c.h.b16 %v244
    %v257 = vunpack.c.h.b16 %v245
    %v258 = vpack.c.b16 %v251, %v250
    %v259 = vpack.c.b16 %v253, %v252
    %v260 = vpack.c.b16 %v255, %v254
    %v261 = vpack.c.b16 %v257, %v256
    %266 = vst [vmem:[#allocation7] sm:$0xff] %v258
    %267 = vst [vmem:[#allocation7 + $0x8] sm:$0xff] %v259
    %268 = vst [vmem:[#allocation7 + $0x10] sm:$0xff] %v260
    %269 = vst [vmem:[#allocation7 + $0x18] sm:$0xff] %v261
    %v270 = vpack.c.bf16 %v179, %v175
    %v271 = vpack.c.bf16 %v181, %v177
    %v272 = vpack.c.bf16 %v231, %v228
    %v273 = vpack.c.bf16 %v189, %v185
    %v274 = vpack.c.bf16 %v191, %v187
    %v275 = vpack.c.bf16 %v239, %v236
    %v282 = vunpack.c.l.b16 %v270
    %v283 = vunpack.c.l.b16 %v271
    %v284 = vunpack.c.l.b16 %v272
    %v285 = vunpack.c.h.b16 %v270
    %v286 = vunpack.c.h.b16 %v271
    %v287 = vunpack.c.h.b16 %v272
    %v288 = vunpack.c.l.b16 %v273
    %v289 = vunpack.c.l.b16 %v274
    %v290 = vunpack.c.l.b16 %v275
    %v291 = vunpack.c.h.b16 %v273
    %v292 = vunpack.c.h.b16 %v274
    %v293 = vunpack.c.h.b16 %v275
    %v294 = vpack.c.b16 %v283, %v282
    %v295 = vpack.c.b16 %v284, %v284
    %v296 = vpack.c.b16 %v286, %v285
    %v297 = vpack.c.b16 %v287, %v287
    %v298 = vpack.c.b16 %v289, %v288
    %v299 = vpack.c.b16 %v290, %v290
    %v300 = vpack.c.b16 %v292, %v291
    %v301 = vpack.c.b16 %v293, %v293
    %310 = vst [vmem:[#allocation8] sm:$0xff] %v294
    %311 = vst [vmem:[#allocation8 + $0x8] sm:$0xf] %v295
    %312 = vst [vmem:[#allocation8 + $0xc] sm:$0xff] %v296
    %313 = vst [vmem:[#allocation8 + $0x14] sm:$0xf] %v297
    %314 = vst [vmem:[#allocation8 + $0x18] sm:$0xff] %v298
    %315 = vst [vmem:[#allocation8 + $0x20] sm:$0xf] %v299
    %316 = vst [vmem:[#allocation8 + $0x24] sm:$0xff] %v300
    %317 = vst [vmem:[#allocation8 + $0x2c] sm:$0xf] %v301
    // Predicated region
    $region18: #{tpu_custom_call.1} parent=1 // pred_check
      _
    $region19: #{tpu_custom_call.1} parent=1 // pred_check_branch
      %319 = sbr.rel (0) target = $region21
    $region20: #{tpu_custom_call.1} parent=1 // pred_region
      %s321 = ssub.s32 512, 512
      %322 = vsyncadd [#allocation4], %s321
      %s323 = sshll.u32 [#allocation7], 4
      %s324 = int_to_ptr.vmem [resolvable:$true] %s323
      %329 = dma.vmem_to_hbm [thread:$0]  %s324, 512, %s2, [#allocation4], 128, 128, 8
    $region21: #{tpu_custom_call.1} parent=1 // pred_fallthru
      _
    // Predicated region
    $region22: #{tpu_custom_call.1} parent=1 // pred_check
      _
    $region23: #{tpu_custom_call.1} parent=1 // pred_check_branch
      %331 = sbr.rel (0) target = $region25
    $region24: #{tpu_custom_call.1} parent=1 // pred_region
      %s333 = ssub.s32 768, 768
      %334 = vsyncadd [#allocation9], %s333
      %s335 = sshll.u32 [#allocation8], 4
      %s336 = int_to_ptr.vmem [resolvable:$true] %s335
      %341 = dma.vmem_to_hbm [thread:$0]  %s336, 768, %s3, [#allocation9], 192, 192, 12
    $region25: #{tpu_custom_call.1} parent=1 // pred_fallthru
      _
    // Predicated region
    $region26: #{tpu_custom_call.1} parent=1 // pred_check
      _
    $region27: #{tpu_custom_call.1} parent=1 // pred_check_branch
      %343 = sbr.rel (0) target = $region29
    $region28: #{tpu_custom_call.1} parent=1 // pred_region
      %344 = dma.done [#allocation4], 512
    $region29: #{tpu_custom_call.1} parent=1 // pred_fallthru
      _
    // Predicated region
    $region30: #{tpu_custom_call.1} parent=1 // pred_check
      _
    $region31: #{tpu_custom_call.1} parent=1 // pred_check_branch
      %346 = sbr.rel (0) target = $region33
    $region32: #{tpu_custom_call.1} parent=1 // pred_region
      %347 = dma.done [#allocation9], 768
    $region33: #{tpu_custom_call.1} parent=1 // pred_fallthru
      _
    %348 = vsyncpa [#allocation3], 1
    %349 = vsyncpa [#allocation6], 1
    %350 = vsyncpa [#allocation4], 1
    %351 = vsyncpa [#allocation9], 1

</llo_original>
